<compile_context>
chip_gen: v5e
topology: v5e:2x2
jax: 0.10.0
libtpu: 0.0.40
codegen_flags: <defaults>
</compile_context>

<pallas_src>
import jax
import jax.numpy as jnp
from jax.experimental import pallas as pl
from jax.experimental.pallas import tpu as pltpu


def _fullpad_tunnel_kernel(gate_ref, x0_ref, x1_ref, o_ref):
    # gate_ref: (1,) f32 scalar in SMEM; x0/x1/o: (tm, L) tiles in VMEM.
    g = gate_ref[0]
    x0 = x0_ref[...].astype(jnp.float32)
    x1 = x1_ref[...].astype(jnp.float32)
    o_ref[...] = (x0 + g * x1).astype(o_ref.dtype)


def _round_down(x, m):
    return (x // m) * m


def _pick_lane_width(total, max_l=8192):
    """Largest multiple of 128 that divides `total` and is <= max_l, or None."""
    if total % 128 != 0:
        return None
    best = None
    l = 128
    top = min(total, max_l)
    while l <= top:
        if total % l == 0:
            best = l
        l += 128
    return best


def _vmem_budget():
    """(vmem_limit_bytes, per-input tile-byte target), tuned per generation."""
    try:
        cap = int(pltpu.get_tpu_info().vmem_capacity_bytes)
    except Exception:
        cap = 64 * 1024 * 1024  # conservative fallback (v7x per-TC VMEM)
    # v7x (64 MiB phys) -> 48 MiB scoped limit, ~4 MiB per-input tiles.
    # v5e/v6e (128 MiB) -> 64 MiB scoped limit, ~5.3 MiB per-input tiles.
    vmem_limit = min(3 * cap // 4, 64 * 1024 * 1024)
    tile_target = max(1 << 20, min(vmem_limit // 12, 8 << 20))
    return vmem_limit, tile_target


def _choose_tile_rows(rows, lane_width, itemsize, tile_target_bytes):
    """Sublane-aligned row tile near the target size, with a ~1 MiB floor."""
    align = max(8, 32 // max(itemsize, 1))  # 8 (f32), 16 (bf16/f16), 32 (int8)
    row_bytes = lane_width * itemsize
    tm = max(align, _round_down(tile_target_bytes // row_bytes, align))
    if tm >= rows:
        # Whole array fits in one tile. Full-dim block is always legal.
        tm = rows
        # Split into 2 grid steps (pipelining + v7x 2-TC sharding) only if
        # both halves keep >= ~1 MiB per input.
        half = -(-rows // 2)
        half = -(-half // align) * align
        if half < rows and half * row_bytes >= (1 << 20):
            tm = half
    return tm


def fullpad_tunnel(x0, x1, gate, *, min_pallas_bytes=256 * 1024,
                   max_lane_width=8192):
    """out = x0 + gate * x1  (x0, x1: same-shape arrays; gate: scalar)."""
    assert x0.shape == x1.shape and x0.dtype == x1.dtype
    orig_shape = x0.shape
    dtype = x0.dtype
    total = int(x0.size)
    itemsize = jnp.dtype(dtype).itemsize
    gate_f32 = jnp.asarray(gate, dtype=jnp.float32)

    L = _pick_lane_width(total, max_lane_width)
    if L is None or total * itemsize < min_pallas_bytes:
        # Tiny tensor, or element count not a multiple of 128: plain fused
        # XLA elementwise is already at the HBM roofline (3T bytes), which
        # beats padding/slicing copies around a pallas_call.
        out = x0.astype(jnp.float32) + gate_f32 * x1.astype(jnp.float32)
        return out.astype(dtype).reshape(orig_shape)

    rows = total // L
    x0_2d = x0.reshape(rows, L)  # contiguous reshape: free, no extra traffic
    x1_2d = x1.reshape(rows, L)

    vmem_limit, tile_target = _vmem_budget()
    tm = _choose_tile_rows(rows, L, itemsize, tile_target)
    grid = (pl.cdiv(rows, tm),)

    out_2d = pl.pallas_call(
        _fullpad_tunnel_kernel,
        out_shape=jax.ShapeDtypeStruct((rows, L), dtype),
        grid_spec=pltpu.PrefetchScalarGridSpec(
            num_scalar_prefetch=0,
            grid=grid,
            in_specs=[
                pl.BlockSpec(memory_space=pltpu.MemorySpace.SMEM),  # gate
                pl.BlockSpec((tm, L), lambda i: (i, 0)),            # x0 tile
                pl.BlockSpec((tm, L), lambda i: (i, 0)),            # x1 tile
            ],
            out_specs=pl.BlockSpec((tm, L), lambda i: (i, 0)),
        ),
        compiler_params=pltpu.CompilerParams(
            dimension_semantics=("parallel",),
            vmem_limit_bytes=vmem_limit,
        ),
        cost_estimate=pl.CostEstimate(
            flops=2 * total,
            transcendentals=0,
            bytes_accessed=3 * total * itemsize,
        ),
    )(gate_f32.reshape((1,)), x0_2d, x1_2d)

    return out_2d.reshape(orig_shape)


if __name__ == "__main__":
    key = jax.random.PRNGKey(0)
    k = jax.random.split(key, 6)

    gate_init = jnp.float32(0.0)   # module's default init
    gate_test = jnp.float32(0.5)   # nonzero gate exercises the gated path

    # (1) Docstring-sized feature map -> Pallas path (lane-dense slab).
    shape_a = (2, 64, 32, 32)
    a0 = jax.random.normal(k[0], shape_a, dtype=jnp.float32)
    a1 = jax.random.normal(k[1], shape_a, dtype=jnp.float32)
    out_a0 = jax.block_until_ready(fullpad_tunnel(a0, a1, gate_init))
    out_a1 = jax.block_until_ready(fullpad_tunnel(a0, a1, gate_test))
    assert out_a1.shape == shape_a and out_a1.dtype == a0.dtype
    assert jnp.allclose(out_a0, a0 + gate_init * a1, atol=1e-6)
    assert jnp.allclose(out_a1, a0 + gate_test * a1, atol=1e-6)

    # (2) Small NCHW shape -> fast path (fused plain elementwise).
    shape_b = (2, 4, 16, 16)
    b0 = jax.random.normal(k[2], shape_b, dtype=jnp.float32)
    b1 = jax.random.normal(k[3], shape_b, dtype=jnp.float32)
    out_b = jax.block_until_ready(fullpad_tunnel(b0, b1, gate_test))
    assert out_b.shape == shape_b and out_b.dtype == b0.dtype
    assert jnp.allclose(out_b, b0 + gate_test * b1, atol=1e-6)

    # (3) Non-lane-friendly spatial (H*W = 196) whose total IS a multiple
    #     of 128 -> Pallas path with divisor-derived lane width (no padding).
    shape_c = (2, 128, 14, 14)
    c0 = jax.random.normal(k[4], shape_c, dtype=jnp.float32)
    c1 = jax.random.normal(k[5], shape_c, dtype=jnp.float32)
    out_c = jax.block_until_ready(
        fullpad_tunnel(c0, c1, gate_test, min_pallas_bytes=0))
    assert out_c.shape == shape_c and out_c.dtype == c0.dtype
    assert jnp.allclose(out_c, c0 + gate_test * c1, atol=1e-6)

    # (4) Tiny, 128-indivisible total (1*3*7*7 = 147) -> fast path.
    shape_d = (1, 3, 7, 7)
    d0 = jax.random.normal(k[0], shape_d, dtype=jnp.float32)
    d1 = jax.random.normal(k[1], shape_d, dtype=jnp.float32)
    out_d = jax.block_until_ready(fullpad_tunnel(d0, d1, gate_test))
    assert out_d.shape == shape_d
    assert jnp.allclose(out_d, d0 + gate_test * d1, atol=1e-6)

    print("KERNEL_OK")
</pallas_src>

<mosaic_0001>
module attributes {stable_mosaic.version = 11 : i64} {
  func.func @_fullpad_tunnel_kernel(%arg0: i32, %arg1: memref<1xf32, #tpu.memory_space<smem>>, %arg2: memref<16x8192xf32, #tpu.memory_space<vmem>>, %arg3: memref<16x8192xf32, #tpu.memory_space<vmem>>, %arg4: memref<16x8192xf32, #tpu.memory_space<vmem>>) attributes {dimension_semantics = [#tpu.dimension_semantics<parallel>], iteration_bounds = array<i64: 1>, scalar_prefetch = 0 : i64, scratch_operands = 0 : i64, tpu.core_type = #tpu.core_type<tc>, window_params = [{transform_indices = @transform_0, window_bounds = array<i64: 1>}, {transform_indices = @transform_1, window_bounds = array<i64: 16, 8192>}, {transform_indices = @transform_2, window_bounds = array<i64: 16, 8192>}, {transform_indices = @transform_3, window_bounds = array<i64: 16, 8192>}]} {
    %c0 = arith.constant 0 : index
    %0 = memref.load %arg1[%c0] : memref<1xf32, #tpu.memory_space<smem>>
    %c0_0 = arith.constant 0 : index
    %c0_1 = arith.constant 0 : index
    %1 = vector.load %arg2[%c0_0, %c0_1] : memref<16x8192xf32, #tpu.memory_space<vmem>>, vector<16x8192xf32>
    %c0_2 = arith.constant 0 : index
    %c0_3 = arith.constant 0 : index
    %2 = vector.load %arg3[%c0_2, %c0_3] : memref<16x8192xf32, #tpu.memory_space<vmem>>, vector<16x8192xf32>
    %3 = vector.broadcast %0 : f32 to vector<16x8192xf32>
    %4 = arith.mulf %3, %2 : vector<16x8192xf32>
    %5 = arith.addf %1, %4 : vector<16x8192xf32>
    %c0_4 = arith.constant 0 : index
    %c0_5 = arith.constant 0 : index
    %6 = vector.load %arg4[%c0_4, %c0_5] : memref<16x8192xf32, #tpu.memory_space<vmem>>, vector<16x8192xf32>
    tpu.vector_store %arg4[%c0_4, %c0_5], %5 {strides = array<i32>} : memref<16x8192xf32, #tpu.memory_space<vmem>>, vector<16x8192xf32>,
    return
  }
  func.func @transform_0(%arg0: i32) -> i32 {
    %c0_i32 = arith.constant 0 : i32
    %c0_i32_0 = arith.constant 0 : i32
    return %c0_i32 : i32
  }
  func.func @transform_1(%arg0: i32) -> (i32, i32) {
    %c0_i32 = arith.constant 0 : i32
    %c0_i32_0 = arith.constant 0 : i32
    return %arg0, %c0_i32 : i32, i32
  }
  func.func @transform_2(%arg0: i32) -> (i32, i32) {
    %c0_i32 = arith.constant 0 : i32
    %c0_i32_0 = arith.constant 0 : i32
    return %arg0, %c0_i32 : i32, i32
  }
  func.func @transform_3(%arg0: i32) -> (i32, i32) {
    %c0_i32 = arith.constant 0 : i32
    %c0_i32_0 = arith.constant 0 : i32
    return %arg0, %c0_i32 : i32, i32
  }
}

</mosaic_0001>

<llo_original>
// kernel: tpu_custom_call.1
$region0: #{tpu_custom_call.1}
  #allocation0 [shape = 'u32[]', space=smem, size = 0x4, offset = 0x4, fixed_abs, tag = 'smem constant byte address 0x4 - core index']
  #allocation1 [shape = 'u32[72,128]{1,0:T(1,128)}', space=vmem, size = 0x9000, scoped, tag = 'internal scratch']
  #allocation2 [shape = 'f32[1]{0:T(128)S(6)}', space=smem, size = 0x200, scoped, tag = 'scoped memory for tpu_custom_call.1']
  %s0 = inlined_call_operand.<no memory space> [shape: f32[1], index: 0, kind: input, shape index: {}]
  %s1 = inlined_call_operand.hbm [shape: f32[16,8192], index: 1, kind: input, shape index: {}]
  %s2 = inlined_call_operand.hbm [shape: f32[16,8192], index: 2, kind: input, shape index: {}]
  %s3 = inlined_call_operand.hbm [shape: f32[16,8192], index: 3, kind: output, shape index: {}]
  %s4 = sld [smem:[#allocation0]]
  $region30: #{tpu_custom_call.1} parent=0
    _
  %s6 = ssub.s32 1, %s4
  %s7 = scalar_select 0, %s6, %s4
  %8 = sst [smem:[#allocation2]] %s0
  $region1: #{tpu_custom_call.1} parent=0
    #allocation3 [shape = 'u8[524288]{0}', space=vmem, size = 0x80000, scoped, tag = 'input window, operand 1, single buffered']
    #allocation4 [shape = 's32[1]{0}', space=sflag, size = 0x4, scoped, tag = 'scoped memory for tpu_custom_call.1']
    #allocation5 [shape = 's32[1]{0}', space=sflag, size = 0x4, scoped, tag = 'scoped memory for tpu_custom_call.1']
    #allocation6 [shape = 'u8[524288]{0}', space=vmem, size = 0x80000, scoped, tag = 'input window, operand 2, single buffered']
    #allocation7 [shape = 's32[1]{0}', space=sflag, size = 0x4, scoped, tag = 'scoped memory for tpu_custom_call.1']
    #allocation8 [shape = 'u8[524288]{0}', space=vmem, size = 0x80000, scoped, tag = 'output window, operand 0, single buffered']
    %9 = vsyncpa [#allocation4], 0
    %10 = vsyncpa [#allocation7], 0
    %11 = vsyncpa [#allocation5], 0
    // Predicated region
    $region2: #{tpu_custom_call.1} parent=1 // pred_check
      _
    $region3: #{tpu_custom_call.1} parent=1 // pred_check_branch
      %13 = sbr.rel (0) target = $region5
    $region4: #{tpu_custom_call.1} parent=1 // pred_region
      _
    $region5: #{tpu_custom_call.1} parent=1 // pred_fallthru
      _
    // Predicated region
    $region6: #{tpu_custom_call.1} parent=1 // pred_check
      _
    $region7: #{tpu_custom_call.1} parent=1 // pred_check_branch
      %15 = sbr.rel (0) target = $region9
    $region8: #{tpu_custom_call.1} parent=1 // pred_region
      %17 = vsyncadd [#allocation4], 0
      %s18 = sshll.u32 %s1, 4
      %s19 = int_to_ptr.hbm [resolvable:$true] %s18
      %s20 = sshll.u32 [#allocation3], 4
      %s21 = int_to_ptr.vmem [resolvable:$true] %s20
      %26 = dma.hbm_to_vmem [thread:$0]  %s19, 16384, %s21, [#allocation4], 8192, 8192, 512
    $region9: #{tpu_custom_call.1} parent=1 // pred_fallthru
      _
    // Predicated region
    $region10: #{tpu_custom_call.1} parent=1 // pred_check
      _
    $region11: #{tpu_custom_call.1} parent=1 // pred_check_branch
      %28 = sbr.rel (0) target = $region13
    $region12: #{tpu_custom_call.1} parent=1 // pred_region
      %30 = vsyncadd [#allocation7], 0
      %s31 = sshll.u32 %s2, 4
      %s32 = int_to_ptr.hbm [resolvable:$true] %s31
      %s33 = sshll.u32 [#allocation6], 4
      %s34 = int_to_ptr.vmem [resolvable:$true] %s33
      %39 = dma.hbm_to_vmem [thread:$0]  %s32, 16384, %s34, [#allocation7], 8192, 8192, 512
    $region13: #{tpu_custom_call.1} parent=1 // pred_fallthru
      _
    // Predicated region
    $region14: #{tpu_custom_call.1} parent=1 // pred_check
      _
    $region15: #{tpu_custom_call.1} parent=1 // pred_check_branch
      %41 = sbr.rel (0) target = $region17
    $region16: #{tpu_custom_call.1} parent=1 // pred_region
      %43 = dma.done [#allocation4], 16384
    $region17: #{tpu_custom_call.1} parent=1 // pred_fallthru
      _
    // Predicated region
    $region18: #{tpu_custom_call.1} parent=1 // pred_check
      _
    $region19: #{tpu_custom_call.1} parent=1 // pred_check_branch
      %45 = sbr.rel (0) target = $region21
    $region20: #{tpu_custom_call.1} parent=1 // pred_region
      %47 = dma.done [#allocation7], 16384
    $region21: #{tpu_custom_call.1} parent=1 // pred_fallthru
      _
    %s48 = sld [smem:[#allocation2]]
    %v49 = vld [vmem:[#allocation3] sm:$0xff]
    %v50 = vld [vmem:[#allocation3 + $0x8] sm:$0xff]
    %v51 = vld [vmem:[#allocation3 + $0x10] sm:$0xff]
    %v52 = vld [vmem:[#allocation3 + $0x18] sm:$0xff]
    %v53 = vld [vmem:[#allocation3 + $0x20] sm:$0xff]
    %v54 = vld [vmem:[#allocation3 + $0x28] sm:$0xff]
    %v55 = vld [vmem:[#allocation3 + $0x30] sm:$0xff]
    %v56 = vld [vmem:[#allocation3 + $0x38] sm:$0xff]
    %v57 = vld [vmem:[#allocation3 + $0x40] sm:$0xff]
    %v58 = vld [vmem:[#allocation3 + $0x48] sm:$0xff]
    %v59 = vld [vmem:[#allocation3 + $0x50] sm:$0xff]
    %v60 = vld [vmem:[#allocation3 + $0x58] sm:$0xff]
    %v61 = vld [vmem:[#allocation3 + $0x60] sm:$0xff]
    %v62 = vld [vmem:[#allocation3 + $0x68] sm:$0xff]
    %v63 = vld [vmem:[#allocation3 + $0x70] sm:$0xff]
    %v64 = vld [vmem:[#allocation3 + $0x78] sm:$0xff]
    %v65 = vld [vmem:[#allocation3 + $0x80] sm:$0xff]
    %v66 = vld [vmem:[#allocation3 + $0x88] sm:$0xff]
    %v67 = vld [vmem:[#allocation3 + $0x90] sm:$0xff]
    %v68 = vld [vmem:[#allocation3 + $0x98] sm:$0xff]
    %v69 = vld [vmem:[#allocation3 + $0xa0] sm:$0xff]
    %v70 = vld [vmem:[#allocation3 + $0xa8] sm:$0xff]
    %v71 = vld [vmem:[#allocation3 + $0xb0] sm:$0xff]
    %v72 = vld [vmem:[#allocation3 + $0xb8] sm:$0xff]
    %v73 = vld [vmem:[#allocation3 + $0xc0] sm:$0xff]
    %v74 = vld [vmem:[#allocation3 + $0xc8] sm:$0xff]
    %v75 = vld [vmem:[#allocation3 + $0xd0] sm:$0xff]
    %v76 = vld [vmem:[#allocation3 + $0xd8] sm:$0xff]
    %v77 = vld [vmem:[#allocation3 + $0xe0] sm:$0xff]
    %v78 = vld [vmem:[#allocation3 + $0xe8] sm:$0xff]
    %v79 = vld [vmem:[#allocation3 + $0xf0] sm:$0xff]
    %v80 = vld [vmem:[#allocation3 + $0xf8] sm:$0xff]
    %v81 = vld [vmem:[#allocation3 + $0x100] sm:$0xff]
    %v82 = vld [vmem:[#allocation3 + $0x108] sm:$0xff]
    %v83 = vld [vmem:[#allocation3 + $0x110] sm:$0xff]
    %v84 = vld [vmem:[#allocation3 + $0x118] sm:$0xff]
    %v85 = vld [vmem:[#allocation3 + $0x120] sm:$0xff]
    %v86 = vld [vmem:[#allocation3 + $0x128] sm:$0xff]
    %v87 = vld [vmem:[#allocation3 + $0x130] sm:$0xff]
    %v88 = vld [vmem:[#allocation3 + $0x138] sm:$0xff]
    %v89 = vld [vmem:[#allocation3 + $0x140] sm:$0xff]
    %v90 = vld [vmem:[#allocation3 + $0x148] sm:$0xff]
    %v91 = vld [vmem:[#allocation3 + $0x150] sm:$0xff]
    %v92 = vld [vmem:[#allocation3 + $0x158] sm:$0xff]
    %v93 = vld [vmem:[#allocation3 + $0x160] sm:$0xff]
    %v94 = vld [vmem:[#allocation3 + $0x168] sm:$0xff]
    %v95 = vld [vmem:[#allocation3 + $0x170] sm:$0xff]
    %v96 = vld [vmem:[#allocation3 + $0x178] sm:$0xff]
    %v97 = vld [vmem:[#allocation3 + $0x180] sm:$0xff]
    %v98 = vld [vmem:[#allocation3 + $0x188] sm:$0xff]
    %v99 = vld [vmem:[#allocation3 + $0x190] sm:$0xff]
    %v100 = vld [vmem:[#allocation3 + $0x198] sm:$0xff]
    %v101 = vld [vmem:[#allocation3 + $0x1a0] sm:$0xff]
    %v102 = vld [vmem:[#allocation3 + $0x1a8] sm:$0xff]
    %v103 = vld [vmem:[#allocation3 + $0x1b0] sm:$0xff]
    %v104 = vld [vmem:[#allocation3 + $0x1b8] sm:$0xff]
    %v105 = vld [vmem:[#allocation3 + $0x1c0] sm:$0xff]
    %v106 = vld [vmem:[#allocation3 + $0x1c8] sm:$0xff]
    %v107 = vld [vmem:[#allocation3 + $0x1d0] sm:$0xff]
    %v108 = vld [vmem:[#allocation3 + $0x1d8] sm:$0xff]
    %v109 = vld [vmem:[#allocation3 + $0x1e0] sm:$0xff]
    %v110 = vld [vmem:[#allocation3 + $0x1e8] sm:$0xff]
    %v111 = vld [vmem:[#allocation3 + $0x1f0] sm:$0xff]
    %v112 = vld [vmem:[#allocation3 + $0x1f8] sm:$0xff]
    %v113 = vld [vmem:[#allocation3 + $0x200] sm:$0xff]
    %v114 = vld [vmem:[#allocation3 + $0x208] sm:$0xff]
    %v115 = vld [vmem:[#allocation3 + $0x210] sm:$0xff]
    %v116 = vld [vmem:[#allocation3 + $0x218] sm:$0xff]
    %v117 = vld [vmem:[#allocation3 + $0x220] sm:$0xff]
    %v118 = vld [vmem:[#allocation3 + $0x228] sm:$0xff]
    %v119 = vld [vmem:[#allocation3 + $0x230] sm:$0xff]
    %v120 = vld [vmem:[#allocation3 + $0x238] sm:$0xff]
    %v121 = vld [vmem:[#allocation3 + $0x240] sm:$0xff]
    %v122 = vld [vmem:[#allocation3 + $0x248] sm:$0xff]
    %v123 = vld [vmem:[#allocation3 + $0x250] sm:$0xff]
    %v124 = vld [vmem:[#allocation3 + $0x258] sm:$0xff]
    %v125 = vld [vmem:[#allocation3 + $0x260] sm:$0xff]
    %v126 = vld [vmem:[#allocation3 + $0x268] sm:$0xff]
    %v127 = vld [vmem:[#allocation3 + $0x270] sm:$0xff]
    %v128 = vld [vmem:[#allocation3 + $0x278] sm:$0xff]
    %v129 = vld [vmem:[#allocation3 + $0x280] sm:$0xff]
    %v130 = vld [vmem:[#allocation3 + $0x288] sm:$0xff]
    %v131 = vld [vmem:[#allocation3 + $0x290] sm:$0xff]
    %v132 = vld [vmem:[#allocation3 + $0x298] sm:$0xff]
    %v133 = vld [vmem:[#allocation3 + $0x2a0] sm:$0xff]
    %v134 = vld [vmem:[#allocation3 + $0x2a8] sm:$0xff]
    %v135 = vld [vmem:[#allocation3 + $0x2b0] sm:$0xff]
    %v136 = vld [vmem:[#allocation3 + $0x2b8] sm:$0xff]
    %v137 = vld [vmem:[#allocation3 + $0x2c0] sm:$0xff]
    %v138 = vld [vmem:[#allocation3 + $0x2c8] sm:$0xff]
    %v139 = vld [vmem:[#allocation3 + $0x2d0] sm:$0xff]
    %v140 = vld [vmem:[#allocation3 + $0x2d8] sm:$0xff]
    %v141 = vld [vmem:[#allocation3 + $0x2e0] sm:$0xff]
    %v142 = vld [vmem:[#allocation3 + $0x2e8] sm:$0xff]
    %v143 = vld [vmem:[#allocation3 + $0x2f0] sm:$0xff]
    %v144 = vld [vmem:[#allocation3 + $0x2f8] sm:$0xff]
    %v145 = vld [vmem:[#allocation3 + $0x300] sm:$0xff]
    %v146 = vld [vmem:[#allocation3 + $0x308] sm:$0xff]
    %v147 = vld [vmem:[#allocation3 + $0x310] sm:$0xff]
    %v148 = vld [vmem:[#allocation3 + $0x318] sm:$0xff]
    %v149 = vld [vmem:[#allocation3 + $0x320] sm:$0xff]
    %v150 = vld [vmem:[#allocation3 + $0x328] sm:$0xff]
    %v151 = vld [vmem:[#allocation3 + $0x330] sm:$0xff]
    %v152 = vld [vmem:[#allocation3 + $0x338] sm:$0xff]
    %v153 = vld [vmem:[#allocation3 + $0x340] sm:$0xff]
    %v154 = vld [vmem:[#allocation3 + $0x348] sm:$0xff]
    %v155 = vld [vmem:[#allocation3 + $0x350] sm:$0xff]
    %v156 = vld [vmem:[#allocation3 + $0x358] sm:$0xff]
    %v157 = vld [vmem:[#allocation3 + $0x360] sm:$0xff]
    %v158 = vld [vmem:[#allocation3 + $0x368] sm:$0xff]
    %v159 = vld [vmem:[#allocation3 + $0x370] sm:$0xff]
    %v160 = vld [vmem:[#allocation3 + $0x378] sm:$0xff]
    %v161 = vld [vmem:[#allocation3 + $0x380] sm:$0xff]
    %v162 = vld [vmem:[#allocation3 + $0x388] sm:$0xff]
    %v163 = vld [vmem:[#allocation3 + $0x390] sm:$0xff]
    %v164 = vld [vmem:[#allocation3 + $0x398] sm:$0xff]
    %v165 = vld [vmem:[#allocation3 + $0x3a0] sm:$0xff]
    %v166 = vld [vmem:[#allocation3 + $0x3a8] sm:$0xff]
    %v167 = vld [vmem:[#allocation3 + $0x3b0] sm:$0xff]
    %v168 = vld [vmem:[#allocation3 + $0x3b8] sm:$0xff]
    %v169 = vld [vmem:[#allocation3 + $0x3c0] sm:$0xff]
    %v170 = vld [vmem:[#allocation3 + $0x3c8] sm:$0xff]
    %v171 = vld [vmem:[#allocation3 + $0x3d0] sm:$0xff]
    %v172 = vld [vmem:[#allocation3 + $0x3d8] sm:$0xff]
    %v173 = vld [vmem:[#allocation3 + $0x3e0] sm:$0xff]
    %v174 = vld [vmem:[#allocation3 + $0x3e8] sm:$0xff]
    %v175 = vld [vmem:[#allocation3 + $0x3f0] sm:$0xff]
    %v176 = vld [vmem:[#allocation3 + $0x3f8] sm:$0xff]
    %v177 = vld [vmem:[#allocation6] sm:$0xff]
    %v178 = vld [vmem:[#allocation6 + $0x8] sm:$0xff]
    %v179 = vld [vmem:[#allocation6 + $0x10] sm:$0xff]
    %v180 = vld [vmem:[#allocation6 + $0x18] sm:$0xff]
    %v181 = vld [vmem:[#allocation6 + $0x20] sm:$0xff]
    %v182 = vld [vmem:[#allocation6 + $0x28] sm:$0xff]
    %v183 = vld [vmem:[#allocation6 + $0x30] sm:$0xff]
    %v184 = vld [vmem:[#allocation6 + $0x38] sm:$0xff]
    %v185 = vld [vmem:[#allocation6 + $0x40] sm:$0xff]
    %v186 = vld [vmem:[#allocation6 + $0x48] sm:$0xff]
    %v187 = vld [vmem:[#allocation6 + $0x50] sm:$0xff]
    %v188 = vld [vmem:[#allocation6 + $0x58] sm:$0xff]
    %v189 = vld [vmem:[#allocation6 + $0x60] sm:$0xff]
    %v190 = vld [vmem:[#allocation6 + $0x68] sm:$0xff]
    %v191 = vld [vmem:[#allocation6 + $0x70] sm:$0xff]
    %v192 = vld [vmem:[#allocation6 + $0x78] sm:$0xff]
    %v193 = vld [vmem:[#allocation6 + $0x80] sm:$0xff]
    %v194 = vld [vmem:[#allocation6 + $0x88] sm:$0xff]
    %v195 = vld [vmem:[#allocation6 + $0x90] sm:$0xff]
    %v196 = vld [vmem:[#allocation6 + $0x98] sm:$0xff]
    %v197 = vld [vmem:[#allocation6 + $0xa0] sm:$0xff]
    %v198 = vld [vmem:[#allocation6 + $0xa8] sm:$0xff]
    %v199 = vld [vmem:[#allocation6 + $0xb0] sm:$0xff]
    %v200 = vld [vmem:[#allocation6 + $0xb8] sm:$0xff]
    %v201 = vld [vmem:[#allocation6 + $0xc0] sm:$0xff]
    %v202 = vld [vmem:[#allocation6 + $0xc8] sm:$0xff]
    %v203 = vld [vmem:[#allocation6 + $0xd0] sm:$0xff]
    %v204 = vld [vmem:[#allocation6 + $0xd8] sm:$0xff]
    %v205 = vld [vmem:[#allocation6 + $0xe0] sm:$0xff]
    %v206 = vld [vmem:[#allocation6 + $0xe8] sm:$0xff]
    %v207 = vld [vmem:[#allocation6 + $0xf0] sm:$0xff]
    %v208 = vld [vmem:[#allocation6 + $0xf8] sm:$0xff]
    %v209 = vld [vmem:[#allocation6 + $0x100] sm:$0xff]
    %v210 = vld [vmem:[#allocation6 + $0x108] sm:$0xff]
    %v211 = vld [vmem:[#allocation6 + $0x110] sm:$0xff]
    %v212 = vld [vmem:[#allocation6 + $0x118] sm:$0xff]
    %v213 = vld [vmem:[#allocation6 + $0x120] sm:$0xff]
    %v214 = vld [vmem:[#allocation6 + $0x128] sm:$0xff]
    %v215 = vld [vmem:[#allocation6 + $0x130] sm:$0xff]
    %v216 = vld [vmem:[#allocation6 + $0x138] sm:$0xff]
    %v217 = vld [vmem:[#allocation6 + $0x140] sm:$0xff]
    %v218 = vld [vmem:[#allocation6 + $0x148] sm:$0xff]
    %v219 = vld [vmem:[#allocation6 + $0x150] sm:$0xff]
    %v220 = vld [vmem:[#allocation6 + $0x158] sm:$0xff]
    %v221 = vld [vmem:[#allocation6 + $0x160] sm:$0xff]
    %v222 = vld [vmem:[#allocation6 + $0x168] sm:$0xff]
    %v223 = vld [vmem:[#allocation6 + $0x170] sm:$0xff]
    %v224 = vld [vmem:[#allocation6 + $0x178] sm:$0xff]
    %v225 = vld [vmem:[#allocation6 + $0x180] sm:$0xff]
    %v226 = vld [vmem:[#allocation6 + $0x188] sm:$0xff]
    %v227 = vld [vmem:[#allocation6 + $0x190] sm:$0xff]
    %v228 = vld [vmem:[#allocation6 + $0x198] sm:$0xff]
    %v229 = vld [vmem:[#allocation6 + $0x1a0] sm:$0xff]
    %v230 = vld [vmem:[#allocation6 + $0x1a8] sm:$0xff]
    %v231 = vld [vmem:[#allocation6 + $0x1b0] sm:$0xff]
    %v232 = vld [vmem:[#allocation6 + $0x1b8] sm:$0xff]
    %v233 = vld [vmem:[#allocation6 + $0x1c0] sm:$0xff]
    %v234 = vld [vmem:[#allocation6 + $0x1c8] sm:$0xff]
    %v235 = vld [vmem:[#allocation6 + $0x1d0] sm:$0xff]
    %v236 = vld [vmem:[#allocation6 + $0x1d8] sm:$0xff]
    %v237 = vld [vmem:[#allocation6 + $0x1e0] sm:$0xff]
    %v238 = vld [vmem:[#allocation6 + $0x1e8] sm:$0xff]
    %v239 = vld [vmem:[#allocation6 + $0x1f0] sm:$0xff]
    %v240 = vld [vmem:[#allocation6 + $0x1f8] sm:$0xff]
    %v241 = vld [vmem:[#allocation6 + $0x200] sm:$0xff]
    %v242 = vld [vmem:[#allocation6 + $0x208] sm:$0xff]
    %v243 = vld [vmem:[#allocation6 + $0x210] sm:$0xff]
    %v244 = vld [vmem:[#allocation6 + $0x218] sm:$0xff]
    %v245 = vld [vmem:[#allocation6 + $0x220] sm:$0xff]
    %v246 = vld [vmem:[#allocation6 + $0x228] sm:$0xff]
    %v247 = vld [vmem:[#allocation6 + $0x230] sm:$0xff]
    %v248 = vld [vmem:[#allocation6 + $0x238] sm:$0xff]
    %v249 = vld [vmem:[#allocation6 + $0x240] sm:$0xff]
    %v250 = vld [vmem:[#allocation6 + $0x248] sm:$0xff]
    %v251 = vld [vmem:[#allocation6 + $0x250] sm:$0xff]
    %v252 = vld [vmem:[#allocation6 + $0x258] sm:$0xff]
    %v253 = vld [vmem:[#allocation6 + $0x260] sm:$0xff]
    %v254 = vld [vmem:[#allocation6 + $0x268] sm:$0xff]
    %v255 = vld [vmem:[#allocation6 + $0x270] sm:$0xff]
    %v256 = vld [vmem:[#allocation6 + $0x278] sm:$0xff]
    %v257 = vld [vmem:[#allocation6 + $0x280] sm:$0xff]
    %v258 = vld [vmem:[#allocation6 + $0x288] sm:$0xff]
    %v259 = vld [vmem:[#allocation6 + $0x290] sm:$0xff]
    %v260 = vld [vmem:[#allocation6 + $0x298] sm:$0xff]
    %v261 = vld [vmem:[#allocation6 + $0x2a0] sm:$0xff]
    %v262 = vld [vmem:[#allocation6 + $0x2a8] sm:$0xff]
    %v263 = vld [vmem:[#allocation6 + $0x2b0] sm:$0xff]
    %v264 = vld [vmem:[#allocation6 + $0x2b8] sm:$0xff]
    %v265 = vld [vmem:[#allocation6 + $0x2c0] sm:$0xff]
    %v266 = vld [vmem:[#allocation6 + $0x2c8] sm:$0xff]
    %v267 = vld [vmem:[#allocation6 + $0x2d0] sm:$0xff]
    %v268 = vld [vmem:[#allocation6 + $0x2d8] sm:$0xff]
    %v269 = vld [vmem:[#allocation6 + $0x2e0] sm:$0xff]
    %v270 = vld [vmem:[#allocation6 + $0x2e8] sm:$0xff]
    %v271 = vld [vmem:[#allocation6 + $0x2f0] sm:$0xff]
    %v272 = vld [vmem:[#allocation6 + $0x2f8] sm:$0xff]
    %v273 = vld [vmem:[#allocation6 + $0x300] sm:$0xff]
    %v274 = vld [vmem:[#allocation6 + $0x308] sm:$0xff]
    %v275 = vld [vmem:[#allocation6 + $0x310] sm:$0xff]
    %v276 = vld [vmem:[#allocation6 + $0x318] sm:$0xff]
    %v277 = vld [vmem:[#allocation6 + $0x320] sm:$0xff]
    %v278 = vld [vmem:[#allocation6 + $0x328] sm:$0xff]
    %v279 = vld [vmem:[#allocation6 + $0x330] sm:$0xff]
    %v280 = vld [vmem:[#allocation6 + $0x338] sm:$0xff]
    %v281 = vld [vmem:[#allocation6 + $0x340] sm:$0xff]
    %v282 = vld [vmem:[#allocation6 + $0x348] sm:$0xff]
    %v283 = vld [vmem:[#allocation6 + $0x350] sm:$0xff]
    %v284 = vld [vmem:[#allocation6 + $0x358] sm:$0xff]
    %v285 = vld [vmem:[#allocation6 + $0x360] sm:$0xff]
    %v286 = vld [vmem:[#allocation6 + $0x368] sm:$0xff]
    %v287 = vld [vmem:[#allocation6 + $0x370] sm:$0xff]
    %v288 = vld [vmem:[#allocation6 + $0x378] sm:$0xff]
    %v289 = vld [vmem:[#allocation6 + $0x380] sm:$0xff]
    %v290 = vld [vmem:[#allocation6 + $0x388] sm:$0xff]
    %v291 = vld [vmem:[#allocation6 + $0x390] sm:$0xff]
    %v292 = vld [vmem:[#allocation6 + $0x398] sm:$0xff]
    %v293 = vld [vmem:[#allocation6 + $0x3a0] sm:$0xff]
    %v294 = vld [vmem:[#allocation6 + $0x3a8] sm:$0xff]
    %v295 = vld [vmem:[#allocation6 + $0x3b0] sm:$0xff]
    %v296 = vld [vmem:[#allocation6 + $0x3b8] sm:$0xff]
    %v297 = vld [vmem:[#allocation6 + $0x3c0] sm:$0xff]
    %v298 = vld [vmem:[#allocation6 + $0x3c8] sm:$0xff]
    %v299 = vld [vmem:[#allocation6 + $0x3d0] sm:$0xff]
    %v300 = vld [vmem:[#allocation6 + $0x3d8] sm:$0xff]
    %v301 = vld [vmem:[#allocation6 + $0x3e0] sm:$0xff]
    %v302 = vld [vmem:[#allocation6 + $0x3e8] sm:$0xff]
    %v303 = vld [vmem:[#allocation6 + $0x3f0] sm:$0xff]
    %v304 = vld [vmem:[#allocation6 + $0x3f8] sm:$0xff]
    %v305 = vstv %s48
    %v306 = vmul.f32 %v305, %v177
    %v307 = vmul.f32 %v305, %v178
    %v308 = vmul.f32 %v305, %v179
    %v309 = vmul.f32 %v305, %v180
    %v310 = vmul.f32 %v305, %v181
    %v311 = vmul.f32 %v305, %v182
    %v312 = vmul.f32 %v305, %v183
    %v313 = vmul.f32 %v305, %v184
    %v314 = vmul.f32 %v305, %v185
    %v315 = vmul.f32 %v305, %v186
    %v316 = vmul.f32 %v305, %v187
    %v317 = vmul.f32 %v305, %v188
    %v318 = vmul.f32 %v305, %v189
    %v319 = vmul.f32 %v305, %v190
    %v320 = vmul.f32 %v305, %v191
    %v321 = vmul.f32 %v305, %v192
    %v322 = vmul.f32 %v305, %v193
    %v323 = vmul.f32 %v305, %v194
    %v324 = vmul.f32 %v305, %v195
    %v325 = vmul.f32 %v305, %v196
    %v326 = vmul.f32 %v305, %v197
    %v327 = vmul.f32 %v305, %v198
    %v328 = vmul.f32 %v305, %v199
    %v329 = vmul.f32 %v305, %v200
    %v330 = vmul.f32 %v305, %v201
    %v331 = vmul.f32 %v305, %v202
    %v332 = vmul.f32 %v305, %v203
    %v333 = vmul.f32 %v305, %v204
    %v334 = vmul.f32 %v305, %v205
    %v335 = vmul.f32 %v305, %v206
    %v336 = vmul.f32 %v305, %v207
    %v337 = vmul.f32 %v305, %v208
    %v338 = vmul.f32 %v305, %v209
    %v339 = vmul.f32 %v305, %v210
    %v340 = vmul.f32 %v305, %v211
    %v341 = vmul.f32 %v305, %v212
    %v342 = vmul.f32 %v305, %v213
    %v343 = vmul.f32 %v305, %v214
    %v344 = vmul.f32 %v305, %v215
    %v345 = vmul.f32 %v305, %v216
    %v346 = vmul.f32 %v305, %v217
    %v347 = vmul.f32 %v305, %v218
    %v348 = vmul.f32 %v305, %v219
    %v349 = vmul.f32 %v305, %v220
    %v350 = vmul.f32 %v305, %v221
    %v351 = vmul.f32 %v305, %v222
    %v352 = vmul.f32 %v305, %v223
    %v353 = vmul.f32 %v305, %v224
    %v354 = vmul.f32 %v305, %v225
    %v355 = vmul.f32 %v305, %v226
    %v356 = vmul.f32 %v305, %v227
    %v357 = vmul.f32 %v305, %v228
    %v358 = vmul.f32 %v305, %v229
    %v359 = vmul.f32 %v305, %v230
    %v360 = vmul.f32 %v305, %v231
    %v361 = vmul.f32 %v305, %v232
    %v362 = vmul.f32 %v305, %v233
    %v363 = vmul.f32 %v305, %v234
    %v364 = vmul.f32 %v305, %v235
    %v365 = vmul.f32 %v305, %v236
    %v366 = vmul.f32 %v305, %v237
    %v367 = vmul.f32 %v305, %v238
    %v368 = vmul.f32 %v305, %v239
    %v369 = vmul.f32 %v305, %v240
    %v370 = vmul.f32 %v305, %v241
    %v371 = vmul.f32 %v305, %v242
    %v372 = vmul.f32 %v305, %v243
    %v373 = vmul.f32 %v305, %v244
    %v374 = vmul.f32 %v305, %v245
    %v375 = vmul.f32 %v305, %v246
    %v376 = vmul.f32 %v305, %v247
    %v377 = vmul.f32 %v305, %v248
    %v378 = vmul.f32 %v305, %v249
    %v379 = vmul.f32 %v305, %v250
    %v380 = vmul.f32 %v305, %v251
    %v381 = vmul.f32 %v305, %v252
    %v382 = vmul.f32 %v305, %v253
    %v383 = vmul.f32 %v305, %v254
    %v384 = vmul.f32 %v305, %v255
    %v385 = vmul.f32 %v305, %v256
    %v386 = vmul.f32 %v305, %v257
    %v387 = vmul.f32 %v305, %v258
    %v388 = vmul.f32 %v305, %v259
    %v389 = vmul.f32 %v305, %v260
    %v390 = vmul.f32 %v305, %v261
    %v391 = vmul.f32 %v305, %v262
    %v392 = vmul.f32 %v305, %v263
    %v393 = vmul.f32 %v305, %v264
    %v394 = vmul.f32 %v305, %v265
    %v395 = vmul.f32 %v305, %v266
    %v396 = vmul.f32 %v305, %v267
    %v397 = vmul.f32 %v305, %v268
    %v398 = vmul.f32 %v305, %v269
    %v399 = vmul.f32 %v305, %v270
    %v400 = vmul.f32 %v305, %v271
    %v401 = vmul.f32 %v305, %v272
    %v402 = vmul.f32 %v305, %v273
    %v403 = vmul.f32 %v305, %v274
    %v404 = vmul.f32 %v305, %v275
    %v405 = vmul.f32 %v305, %v276
    %v406 = vmul.f32 %v305, %v277
    %v407 = vmul.f32 %v305, %v278
    %v408 = vmul.f32 %v305, %v279
    %v409 = vmul.f32 %v305, %v280
    %v410 = vmul.f32 %v305, %v281
    %v411 = vmul.f32 %v305, %v282
    %v412 = vmul.f32 %v305, %v283
    %v413 = vmul.f32 %v305, %v284
    %v414 = vmul.f32 %v305, %v285
    %v415 = vmul.f32 %v305, %v286
    %v416 = vmul.f32 %v305, %v287
    %v417 = vmul.f32 %v305, %v288
    %v418 = vmul.f32 %v305, %v289
    %v419 = vmul.f32 %v305, %v290
    %v420 = vmul.f32 %v305, %v291
    %v421 = vmul.f32 %v305, %v292
    %v422 = vmul.f32 %v305, %v293
    %v423 = vmul.f32 %v305, %v294
    %v424 = vmul.f32 %v305, %v295
    %v425 = vmul.f32 %v305, %v296
    %v426 = vmul.f32 %v305, %v297
    %v427 = vmul.f32 %v305, %v298
    %v428 = vmul.f32 %v305, %v299
    %v429 = vmul.f32 %v305, %v300
    %v430 = vmul.f32 %v305, %v301
    %v431 = vmul.f32 %v305, %v302
    %v432 = vmul.f32 %v305, %v303
    %v433 = vmul.f32 %v305, %v304
    %v434 = vadd.f32 %v49, %v306
    %v435 = vadd.f32 %v50, %v307
    %v436 = vadd.f32 %v51, %v308
    %v437 = vadd.f32 %v52, %v309
    %v438 = vadd.f32 %v53, %v310
    %v439 = vadd.f32 %v54, %v311
    %v440 = vadd.f32 %v55, %v312
    %v441 = vadd.f32 %v56, %v313
    %v442 = vadd.f32 %v57, %v314
    %v443 = vadd.f32 %v58, %v315
    %v444 = vadd.f32 %v59, %v316
    %v445 = vadd.f32 %v60, %v317
    %v446 = vadd.f32 %v61, %v318
    %v447 = vadd.f32 %v62, %v319
    %v448 = vadd.f32 %v63, %v320
    %v449 = vadd.f32 %v64, %v321
    %v450 = vadd.f32 %v65, %v322
    %v451 = vadd.f32 %v66, %v323
    %v452 = vadd.f32 %v67, %v324
    %v453 = vadd.f32 %v68, %v325
    %v454 = vadd.f32 %v69, %v326
    %v455 = vadd.f32 %v70, %v327
    %v456 = vadd.f32 %v71, %v328
    %v457 = vadd.f32 %v72, %v329
    %v458 = vadd.f32 %v73, %v330
    %v459 = vadd.f32 %v74, %v331
    %v460 = vadd.f32 %v75, %v332
    %v461 = vadd.f32 %v76, %v333
    %v462 = vadd.f32 %v77, %v334
    %v463 = vadd.f32 %v78, %v335
    %v464 = vadd.f32 %v79, %v336
    %v465 = vadd.f32 %v80, %v337
    %v466 = vadd.f32 %v81, %v338
    %v467 = vadd.f32 %v82, %v339
    %v468 = vadd.f32 %v83, %v340
    %v469 = vadd.f32 %v84, %v341
    %v470 = vadd.f32 %v85, %v342
    %v471 = vadd.f32 %v86, %v343
    %v472 = vadd.f32 %v87, %v344
    %v473 = vadd.f32 %v88, %v345
    %v474 = vadd.f32 %v89, %v346
    %v475 = vadd.f32 %v90, %v347
    %v476 = vadd.f32 %v91, %v348
    %v477 = vadd.f32 %v92, %v349
    %v478 = vadd.f32 %v93, %v350
    %v479 = vadd.f32 %v94, %v351
    %v480 = vadd.f32 %v95, %v352
    %v481 = vadd.f32 %v96, %v353
    %v482 = vadd.f32 %v97, %v354
    %v483 = vadd.f32 %v98, %v355
    %v484 = vadd.f32 %v99, %v356
    %v485 = vadd.f32 %v100, %v357
    %v486 = vadd.f32 %v101, %v358
    %v487 = vadd.f32 %v102, %v359
    %v488 = vadd.f32 %v103, %v360
    %v489 = vadd.f32 %v104, %v361
    %v490 = vadd.f32 %v105, %v362
    %v491 = vadd.f32 %v106, %v363
    %v492 = vadd.f32 %v107, %v364
    %v493 = vadd.f32 %v108, %v365
    %v494 = vadd.f32 %v109, %v366
    %v495 = vadd.f32 %v110, %v367
    %v496 = vadd.f32 %v111, %v368
    %v497 = vadd.f32 %v112, %v369
    %v498 = vadd.f32 %v113, %v370
    %v499 = vadd.f32 %v114, %v371
    %v500 = vadd.f32 %v115, %v372
    %v501 = vadd.f32 %v116, %v373
    %v502 = vadd.f32 %v117, %v374
    %v503 = vadd.f32 %v118, %v375
    %v504 = vadd.f32 %v119, %v376
    %v505 = vadd.f32 %v120, %v377
    %v506 = vadd.f32 %v121, %v378
    %v507 = vadd.f32 %v122, %v379
    %v508 = vadd.f32 %v123, %v380
    %v509 = vadd.f32 %v124, %v381
    %v510 = vadd.f32 %v125, %v382
    %v511 = vadd.f32 %v126, %v383
    %v512 = vadd.f32 %v127, %v384
    %v513 = vadd.f32 %v128, %v385
    %v514 = vadd.f32 %v129, %v386
    %v515 = vadd.f32 %v130, %v387
    %v516 = vadd.f32 %v131, %v388
    %v517 = vadd.f32 %v132, %v389
    %v518 = vadd.f32 %v133, %v390
    %v519 = vadd.f32 %v134, %v391
    %v520 = vadd.f32 %v135, %v392
    %v521 = vadd.f32 %v136, %v393
    %v522 = vadd.f32 %v137, %v394
    %v523 = vadd.f32 %v138, %v395
    %v524 = vadd.f32 %v139, %v396
    %v525 = vadd.f32 %v140, %v397
    %v526 = vadd.f32 %v141, %v398
    %v527 = vadd.f32 %v142, %v399
    %v528 = vadd.f32 %v143, %v400
    %v529 = vadd.f32 %v144, %v401
    %v530 = vadd.f32 %v145, %v402
    %v531 = vadd.f32 %v146, %v403
    %v532 = vadd.f32 %v147, %v404
    %v533 = vadd.f32 %v148, %v405
    %v534 = vadd.f32 %v149, %v406
    %v535 = vadd.f32 %v150, %v407
    %v536 = vadd.f32 %v151, %v408
    %v537 = vadd.f32 %v152, %v409
    %v538 = vadd.f32 %v153, %v410
    %v539 = vadd.f32 %v154, %v411
    %v540 = vadd.f32 %v155, %v412
    %v541 = vadd.f32 %v156, %v413
    %v542 = vadd.f32 %v157, %v414
    %v543 = vadd.f32 %v158, %v415
    %v544 = vadd.f32 %v159, %v416
    %v545 = vadd.f32 %v160, %v417
    %v546 = vadd.f32 %v161, %v418
    %v547 = vadd.f32 %v162, %v419
    %v548 = vadd.f32 %v163, %v420
    %v549 = vadd.f32 %v164, %v421
    %v550 = vadd.f32 %v165, %v422
    %v551 = vadd.f32 %v166, %v423
    %v552 = vadd.f32 %v167, %v424
    %v553 = vadd.f32 %v168, %v425
    %v554 = vadd.f32 %v169, %v426
    %v555 = vadd.f32 %v170, %v427
    %v556 = vadd.f32 %v171, %v428
    %v557 = vadd.f32 %v172, %v429
    %v558 = vadd.f32 %v173, %v430
    %v559 = vadd.f32 %v174, %v431
    %v560 = vadd.f32 %v175, %v432
    %v561 = vadd.f32 %v176, %v433
    %562 = vst [vmem:[#allocation8] sm:$0xff] %v434
    %563 = vst [vmem:[#allocation8 + $0x8] sm:$0xff] %v435
    %564 = vst [vmem:[#allocation8 + $0x10] sm:$0xff] %v436
    %565 = vst [vmem:[#allocation8 + $0x18] sm:$0xff] %v437
    %566 = vst [vmem:[#allocation8 + $0x20] sm:$0xff] %v438
    %567 = vst [vmem:[#allocation8 + $0x28] sm:$0xff] %v439
    %568 = vst [vmem:[#allocation8 + $0x30] sm:$0xff] %v440
    %569 = vst [vmem:[#allocation8 + $0x38] sm:$0xff] %v441
    %570 = vst [vmem:[#allocation8 + $0x40] sm:$0xff] %v442
    %571 = vst [vmem:[#allocation8 + $0x48] sm:$0xff] %v443
    %572 = vst [vmem:[#allocation8 + $0x50] sm:$0xff] %v444
    %573 = vst [vmem:[#allocation8 + $0x58] sm:$0xff] %v445
    %574 = vst [vmem:[#allocation8 + $0x60] sm:$0xff] %v446
    %575 = vst [vmem:[#allocation8 + $0x68] sm:$0xff] %v447
    %576 = vst [vmem:[#allocation8 + $0x70] sm:$0xff] %v448
    %577 = vst [vmem:[#allocation8 + $0x78] sm:$0xff] %v449
    %578 = vst [vmem:[#allocation8 + $0x80] sm:$0xff] %v450
    %579 = vst [vmem:[#allocation8 + $0x88] sm:$0xff] %v451
    %580 = vst [vmem:[#allocation8 + $0x90] sm:$0xff] %v452
    %581 = vst [vmem:[#allocation8 + $0x98] sm:$0xff] %v453
    %582 = vst [vmem:[#allocation8 + $0xa0] sm:$0xff] %v454
    %583 = vst [vmem:[#allocation8 + $0xa8] sm:$0xff] %v455
    %584 = vst [vmem:[#allocation8 + $0xb0] sm:$0xff] %v456
    %585 = vst [vmem:[#allocation8 + $0xb8] sm:$0xff] %v457
    %586 = vst [vmem:[#allocation8 + $0xc0] sm:$0xff] %v458
    %587 = vst [vmem:[#allocation8 + $0xc8] sm:$0xff] %v459
    %588 = vst [vmem:[#allocation8 + $0xd0] sm:$0xff] %v460
    %589 = vst [vmem:[#allocation8 + $0xd8] sm:$0xff] %v461
    %590 = vst [vmem:[#allocation8 + $0xe0] sm:$0xff] %v462
    %591 = vst [vmem:[#allocation8 + $0xe8] sm:$0xff] %v463
    %592 = vst [vmem:[#allocation8 + $0xf0] sm:$0xff] %v464
    %593 = vst [vmem:[#allocation8 + $0xf8] sm:$0xff] %v465
    %594 = vst [vmem:[#allocation8 + $0x100] sm:$0xff] %v466
    %595 = vst [vmem:[#allocation8 + $0x108] sm:$0xff] %v467
    %596 = vst [vmem:[#allocation8 + $0x110] sm:$0xff] %v468
    %597 = vst [vmem:[#allocation8 + $0x118] sm:$0xff] %v469
    %598 = vst [vmem:[#allocation8 + $0x120] sm:$0xff] %v470
    %599 = vst [vmem:[#allocation8 + $0x128] sm:$0xff] %v471
    %600 = vst [vmem:[#allocation8 + $0x130] sm:$0xff] %v472
    %601 = vst [vmem:[#allocation8 + $0x138] sm:$0xff] %v473
    %602 = vst [vmem:[#allocation8 + $0x140] sm:$0xff] %v474
    %603 = vst [vmem:[#allocation8 + $0x148] sm:$0xff] %v475
    %604 = vst [vmem:[#allocation8 + $0x150] sm:$0xff] %v476
    %605 = vst [vmem:[#allocation8 + $0x158] sm:$0xff] %v477
    %606 = vst [vmem:[#allocation8 + $0x160] sm:$0xff] %v478
    %607 = vst [vmem:[#allocation8 + $0x168] sm:$0xff] %v479
    %608 = vst [vmem:[#allocation8 + $0x170] sm:$0xff] %v480
    %609 = vst [vmem:[#allocation8 + $0x178] sm:$0xff] %v481
    %610 = vst [vmem:[#allocation8 + $0x180] sm:$0xff] %v482
    %611 = vst [vmem:[#allocation8 + $0x188] sm:$0xff] %v483
    %612 = vst [vmem:[#allocation8 + $0x190] sm:$0xff] %v484
    %613 = vst [vmem:[#allocation8 + $0x198] sm:$0xff] %v485
    %614 = vst [vmem:[#allocation8 + $0x1a0] sm:$0xff] %v486
    %615 = vst [vmem:[#allocation8 + $0x1a8] sm:$0xff] %v487
    %616 = vst [vmem:[#allocation8 + $0x1b0] sm:$0xff] %v488
    %617 = vst [vmem:[#allocation8 + $0x1b8] sm:$0xff] %v489
    %618 = vst [vmem:[#allocation8 + $0x1c0] sm:$0xff] %v490
    %619 = vst [vmem:[#allocation8 + $0x1c8] sm:$0xff] %v491
    %620 = vst [vmem:[#allocation8 + $0x1d0] sm:$0xff] %v492
    %621 = vst [vmem:[#allocation8 + $0x1d8] sm:$0xff] %v493
    %622 = vst [vmem:[#allocation8 + $0x1e0] sm:$0xff] %v494
    %623 = vst [vmem:[#allocation8 + $0x1e8] sm:$0xff] %v495
    %624 = vst [vmem:[#allocation8 + $0x1f0] sm:$0xff] %v496
    %625 = vst [vmem:[#allocation8 + $0x1f8] sm:$0xff] %v497
    %626 = vst [vmem:[#allocation8 + $0x200] sm:$0xff] %v498
    %627 = vst [vmem:[#allocation8 + $0x208] sm:$0xff] %v499
    %628 = vst [vmem:[#allocation8 + $0x210] sm:$0xff] %v500
    %629 = vst [vmem:[#allocation8 + $0x218] sm:$0xff] %v501
    %630 = vst [vmem:[#allocation8 + $0x220] sm:$0xff] %v502
    %631 = vst [vmem:[#allocation8 + $0x228] sm:$0xff] %v503
    %632 = vst [vmem:[#allocation8 + $0x230] sm:$0xff] %v504
    %633 = vst [vmem:[#allocation8 + $0x238] sm:$0xff] %v505
    %634 = vst [vmem:[#allocation8 + $0x240] sm:$0xff] %v506
    %635 = vst [vmem:[#allocation8 + $0x248] sm:$0xff] %v507
    %636 = vst [vmem:[#allocation8 + $0x250] sm:$0xff] %v508
    %637 = vst [vmem:[#allocation8 + $0x258] sm:$0xff] %v509
    %638 = vst [vmem:[#allocation8 + $0x260] sm:$0xff] %v510
    %639 = vst [vmem:[#allocation8 + $0x268] sm:$0xff] %v511
    %640 = vst [vmem:[#allocation8 + $0x270] sm:$0xff] %v512
    %641 = vst [vmem:[#allocation8 + $0x278] sm:$0xff] %v513
    %642 = vst [vmem:[#allocation8 + $0x280] sm:$0xff] %v514
    %643 = vst [vmem:[#allocation8 + $0x288] sm:$0xff] %v515
    %644 = vst [vmem:[#allocation8 + $0x290] sm:$0xff] %v516
    %645 = vst [vmem:[#allocation8 + $0x298] sm:$0xff] %v517
    %646 = vst [vmem:[#allocation8 + $0x2a0] sm:$0xff] %v518
    %647 = vst [vmem:[#allocation8 + $0x2a8] sm:$0xff] %v519
    %648 = vst [vmem:[#allocation8 + $0x2b0] sm:$0xff] %v520
    %649 = vst [vmem:[#allocation8 + $0x2b8] sm:$0xff] %v521
    %650 = vst [vmem:[#allocation8 + $0x2c0] sm:$0xff] %v522
    %651 = vst [vmem:[#allocation8 + $0x2c8] sm:$0xff] %v523
    %652 = vst [vmem:[#allocation8 + $0x2d0] sm:$0xff] %v524
    %653 = vst [vmem:[#allocation8 + $0x2d8] sm:$0xff] %v525
    %654 = vst [vmem:[#allocation8 + $0x2e0] sm:$0xff] %v526
    %655 = vst [vmem:[#allocation8 + $0x2e8] sm:$0xff] %v527
    %656 = vst [vmem:[#allocation8 + $0x2f0] sm:$0xff] %v528
    %657 = vst [vmem:[#allocation8 + $0x2f8] sm:$0xff] %v529
    %658 = vst [vmem:[#allocation8 + $0x300] sm:$0xff] %v530
    %659 = vst [vmem:[#allocation8 + $0x308] sm:$0xff] %v531
    %660 = vst [vmem:[#allocation8 + $0x310] sm:$0xff] %v532
    %661 = vst [vmem:[#allocation8 + $0x318] sm:$0xff] %v533
    %662 = vst [vmem:[#allocation8 + $0x320] sm:$0xff] %v534
    %663 = vst [vmem:[#allocation8 + $0x328] sm:$0xff] %v535
    %664 = vst [vmem:[#allocation8 + $0x330] sm:$0xff] %v536
    %665 = vst [vmem:[#allocation8 + $0x338] sm:$0xff] %v537
    %666 = vst [vmem:[#allocation8 + $0x340] sm:$0xff] %v538
    %667 = vst [vmem:[#allocation8 + $0x348] sm:$0xff] %v539
    %668 = vst [vmem:[#allocation8 + $0x350] sm:$0xff] %v540
    %669 = vst [vmem:[#allocation8 + $0x358] sm:$0xff] %v541
    %670 = vst [vmem:[#allocation8 + $0x360] sm:$0xff] %v542
    %671 = vst [vmem:[#allocation8 + $0x368] sm:$0xff] %v543
    %672 = vst [vmem:[#allocation8 + $0x370] sm:$0xff] %v544
    %673 = vst [vmem:[#allocation8 + $0x378] sm:$0xff] %v545
    %674 = vst [vmem:[#allocation8 + $0x380] sm:$0xff] %v546
    %675 = vst [vmem:[#allocation8 + $0x388] sm:$0xff] %v547
    %676 = vst [vmem:[#allocation8 + $0x390] sm:$0xff] %v548
    %677 = vst [vmem:[#allocation8 + $0x398] sm:$0xff] %v549
    %678 = vst [vmem:[#allocation8 + $0x3a0] sm:$0xff] %v550
    %679 = vst [vmem:[#allocation8 + $0x3a8] sm:$0xff] %v551
    %680 = vst [vmem:[#allocation8 + $0x3b0] sm:$0xff] %v552
    %681 = vst [vmem:[#allocation8 + $0x3b8] sm:$0xff] %v553
    %682 = vst [vmem:[#allocation8 + $0x3c0] sm:$0xff] %v554
    %683 = vst [vmem:[#allocation8 + $0x3c8] sm:$0xff] %v555
    %684 = vst [vmem:[#allocation8 + $0x3d0] sm:$0xff] %v556
    %685 = vst [vmem:[#allocation8 + $0x3d8] sm:$0xff] %v557
    %686 = vst [vmem:[#allocation8 + $0x3e0] sm:$0xff] %v558
    %687 = vst [vmem:[#allocation8 + $0x3e8] sm:$0xff] %v559
    %688 = vst [vmem:[#allocation8 + $0x3f0] sm:$0xff] %v560
    %689 = vst [vmem:[#allocation8 + $0x3f8] sm:$0xff] %v561
    // Predicated region
    $region22: #{tpu_custom_call.1} parent=1 // pred_check
      _
    $region23: #{tpu_custom_call.1} parent=1 // pred_check_branch
      %691 = sbr.rel (0) target = $region25
    $region24: #{tpu_custom_call.1} parent=1 // pred_region
      %693 = vsyncadd [#allocation5], 0
      %s694 = sshll.u32 [#allocation8], 4
      %s695 = int_to_ptr.vmem [resolvable:$true] %s694
      %s696 = sshll.u32 %s3, 4
      %s697 = int_to_ptr.hbm [resolvable:$true] %s696
      %702 = dma.vmem_to_hbm [thread:$0]  %s695, 16384, %s697, [#allocation5], 8192, 8192, 512
    $region25: #{tpu_custom_call.1} parent=1 // pred_fallthru
      _
    // Predicated region
    $region26: #{tpu_custom_call.1} parent=1 // pred_check
      _
    $region27: #{tpu_custom_call.1} parent=1 // pred_check_branch
      %704 = sbr.rel (0) target = $region29
    $region28: #{tpu_custom_call.1} parent=1 // pred_region
      %706 = dma.done [#allocation5], 16384
    $region29: #{tpu_custom_call.1} parent=1 // pred_fallthru
      _
    %707 = vsyncpa [#allocation4], 1
    %708 = vsyncpa [#allocation7], 1
    %709 = vsyncpa [#allocation5], 1

</llo_original>
